<compile_context>
chip_gen: v7x
topology: tpu7x:2x2x1
jax: 0.10.0
libtpu: 0.0.40
codegen_flags: <defaults>
</compile_context>

<pallas_src>
import functools
import math

import jax
import jax.numpy as jnp
from jax.experimental import pallas as pl
from jax.experimental.pallas import tpu as pltpu


# ----------------------------------------------------------------------------
# Elementwise activation math (mirrors transformers.get_activation / F.*)
# ----------------------------------------------------------------------------
def _apply_activation(x, hidden_act: str):
    act = hidden_act.lower()
    if act == "relu":
        # Stays in the native dtype (bf16 VPU on v6e/v7x).
        return jnp.maximum(x, jnp.zeros((), x.dtype))
    if act == "leakyrelu":
        # torch.nn.functional.leaky_relu default negative_slope = 0.01
        return jnp.where(x >= 0, x, x * jnp.asarray(0.01, x.dtype))

    # Transcendental paths: compute in f32 for accuracy, caller casts back.
    xf = x.astype(jnp.float32)
    if act == "gelu":
        # exact (erf-based) gelu, matching transformers.get_activation("gelu")
        return 0.5 * xf * (1.0 + jax.lax.erf(xf * (1.0 / math.sqrt(2.0))))
    if act in ("gelu_new", "gelu_python_tanh"):
        c = math.sqrt(2.0 / math.pi)
        return 0.5 * xf * (1.0 + jnp.tanh(c * (xf + 0.044715 * xf * xf * xf)))
    if act == "sigmoid":
        # Single transcendental: sigmoid(x) == 0.5 * (1 + tanh(x / 2)).
        return 0.5 * (1.0 + jnp.tanh(0.5 * xf))
    if act in ("silu", "swish"):
        # x * sigmoid(x), one transcendental per element.
        return xf * (0.5 * (1.0 + jnp.tanh(0.5 * xf)))
    if act == "tanh":
        return jnp.tanh(xf)
    raise ValueError(f"unsupported hidden_act: {hidden_act}")


# ----------------------------------------------------------------------------
# Pallas kernel: elementwise activation on one (tile_rows, lanes) block
# ----------------------------------------------------------------------------
def _activation_kernel(x_ref, o_ref, *, hidden_act: str):
    y = _apply_activation(x_ref[...], hidden_act)
    o_ref[...] = y.astype(o_ref.dtype)


# ----------------------------------------------------------------------------
# Budgets / tiling helpers
# ----------------------------------------------------------------------------
def _device_budgets():
    """(block_bytes, vmem_limit_bytes), derived from the actual hardware."""
    kind = ""
    try:
        kind = jax.devices()[0].device_kind.lower()
    except Exception:
        pass
    vmem_cap = None
    try:
        vmem_cap = int(pltpu.get_tpu_info().vmem_capacity_bytes)
    except Exception:
        vmem_cap = None

    if vmem_cap is not None and vmem_cap <= (64 << 20):
        # v7x-class part: only 64 MiB VMEM per TensorCore.
        block_bytes = 6 << 20
    elif "v6" in kind:
        # v6e: 8 MiB blocks sit on the ~85% HBM-roofline plateau.
        block_bytes = 8 << 20
    elif "v5" in kind:
        # v5e: 6 MiB blocks amortize per-step overhead without OOM risk.
        block_bytes = 6 << 20
    else:
        block_bytes = 6 << 20

    # Live VMEM ~= (in + out) x double-buffer x block = 4 x block; add headroom.
    vmem_limit = 4 * block_bytes + (8 << 20)
    if vmem_cap is not None:
        vmem_limit = min(vmem_limit, vmem_cap // 2)
    return block_bytes, vmem_limit


def _choose_2d_view(x, total, hidden):
    """Return a (rows, lanes) view of x that needs no padding."""
    if x.ndim >= 2 and hidden >= 128 and hidden % 128 == 0:
        # Hidden already maps onto the 128-wide lane axis: free reshape.
        lanes = hidden
    elif total % 128 == 0:
        # Pad-free lane-dense repack: largest multiple-of-128 divisor (<=1024).
        lanes = 128
        d = min(1024, (total // 128) * 128)
        while d >= 128:
            if total % d == 0:
                lanes = d
                break
            d -= 128
    else:
        # Ragged total: keep the natural trailing dim as the lane axis and let
        # the kernel's (masked) stores handle the narrow tail -- no jnp.pad,
        # no output slice, no extra HBM passes.
        lanes = hidden if x.ndim >= 2 else total
    rows = total // lanes
    return x.reshape(rows, lanes), rows, lanes


def _choose_row_tile(rows, lanes, itemsize, block_bytes, sublane):
    """Sublane-aligned row tile honoring the byte budget and >=4 grid blocks."""
    budget_rows = (block_bytes // max(1, lanes * itemsize)) // sublane * sublane
    tile_rows = max(sublane, budget_rows)

    # >=4 blocks (>=2 per TensorCore on v7x megacore) whenever rows allow it,
    # so DMA-in / compute / DMA-out keep overlapping within each core.
    min_blocks = 4
    if rows >= min_blocks * sublane:
        cap = (rows // min_blocks) // sublane * sublane
        if cap >= sublane:
            tile_rows = min(tile_rows, cap)

    if tile_rows >= rows:
        tile_rows = rows  # full-extent block: always layout-legal
    return tile_rows


# ----------------------------------------------------------------------------
# Wrapper
# ----------------------------------------------------------------------------
def activation_function(x, hidden_act: str = "gelu", *,
                        block_bytes: int | None = None,
                        vmem_limit_bytes: int | None = None):
    """Pallas equivalent of Activation_Function_Class(hidden_act)(x)."""
    orig_shape = x.shape
    orig_dtype = x.dtype
    total = int(math.prod(orig_shape)) if orig_shape else 1
    if total == 0:
        return x

    if block_bytes is None or vmem_limit_bytes is None:
        bb, vl = _device_budgets()
        block_bytes = block_bytes or bb
        vmem_limit_bytes = vmem_limit_bytes or vl

    itemsize = jnp.dtype(orig_dtype).itemsize
    sublane = max(8, 32 // itemsize)          # 8 for f32, 16 for bf16, ...
    hidden = orig_shape[-1] if x.ndim >= 1 else 1

    x2d, rows, lanes = _choose_2d_view(x, total, hidden)
    tile_rows = _choose_row_tile(rows, lanes, itemsize, block_bytes, sublane)
    grid = (pl.cdiv(rows, tile_rows),)        # partial last block is fine

    kernel = functools.partial(_activation_kernel, hidden_act=hidden_act)

    out2d = pl.pallas_call(
        kernel,
        out_shape=jax.ShapeDtypeStruct((rows, lanes), orig_dtype),
        grid_spec=pltpu.PrefetchScalarGridSpec(
            num_scalar_prefetch=0,
            grid=grid,
            in_specs=[pl.BlockSpec((tile_rows, lanes), lambda i: (i, 0))],
            out_specs=pl.BlockSpec((tile_rows, lanes), lambda i: (i, 0)),
        ),
        compiler_params=pltpu.CompilerParams(
            dimension_semantics=("parallel",),
            vmem_limit_bytes=vmem_limit_bytes,
        ),
    )(x2d)

    return out2d.reshape(orig_shape)


class ActivationFunctionClass:
    """Thin module-like wrapper mirroring the PyTorch class interface."""

    def __init__(self, hidden_act: str):
        self.hidden_act = hidden_act.lower()

    def __call__(self, x):
        return activation_function(x, self.hidden_act)


# ----------------------------------------------------------------------------
# Demo / self-test
# ----------------------------------------------------------------------------
if __name__ == "__main__":
    key = jax.random.PRNGKey(0)
    # Typical adapter bottleneck activation input: (batch, seq, hidden)
    batch, seq, hidden = 2, 8, 32
    x = jax.random.normal(key, (batch, seq, hidden), dtype=jnp.float32)

    refs = {
        "gelu": lambda v: jax.nn.gelu(v, approximate=False),
        "gelu_new": lambda v: jax.nn.gelu(v, approximate=True),
        "relu": jax.nn.relu,
        "leakyrelu": lambda v: jnp.where(v >= 0, v, 0.01 * v),
        "silu": jax.nn.silu,
        "swish": jax.nn.silu,
        "tanh": jnp.tanh,
        "sigmoid": jax.nn.sigmoid,
    }

    ok = True
    for act, ref_fn in refs.items():
        y = jax.block_until_ready(ActivationFunctionClass(act)(x))
        y_ref = ref_fn(x)
        if y.shape != x.shape or y.dtype != x.dtype:
            ok = False
        elif not jnp.allclose(y, y_ref, atol=2e-5, rtol=2e-5):
            ok = False

    # Lane-native path (hidden multiple of 128) in bf16.
    x2 = jax.random.normal(jax.random.PRNGKey(1), (4, 128), dtype=jnp.bfloat16)
    y2 = jax.block_until_ready(activation_function(x2, "relu"))
    if not jnp.allclose(y2.astype(jnp.float32),
                        jax.nn.relu(x2).astype(jnp.float32)):
        ok = False

    # Multi-block lane-native path (exercises grid > 1).
    x3 = jax.random.normal(jax.random.PRNGKey(2), (16, 16, 128),
                           dtype=jnp.float32)
    y3 = jax.block_until_ready(activation_function(x3, "silu"))
    if not jnp.allclose(y3, jax.nn.silu(x3), atol=2e-5, rtol=2e-5):
        ok = False

    # Ragged path (total not a multiple of 128): handled in-kernel, no pad.
    x4 = jax.random.normal(jax.random.PRNGKey(3), (3, 5, 7), dtype=jnp.float32)
    y4 = jax.block_until_ready(activation_function(x4, "gelu"))
    if not jnp.allclose(y4, jax.nn.gelu(x4, approximate=False),
                        atol=2e-5, rtol=2e-5):
        ok = False

    if ok:
        print("KERNEL_OK")
    else:
        print("KERNEL_MISMATCH")
</pallas_src>

<mosaic_0001>
module attributes {stable_mosaic.version = 11 : i64} {
  func.func @_activation_kernel(%arg0: i32, %arg1: memref<1x512xf32, #tpu.memory_space<vmem>>, %arg2: memref<1x512xf32, #tpu.memory_space<vmem>>) attributes {dimension_semantics = [#tpu.dimension_semantics<parallel>], iteration_bounds = array<i64: 1>, scalar_prefetch = 0 : i64, scratch_operands = 0 : i64, tpu.core_type = #tpu.core_type<tc>, window_params = [{transform_indices = @transform_0, window_bounds = array<i64: 1, 512>}, {transform_indices = @transform_1, window_bounds = array<i64: 1, 512>}]} {
    %c0 = arith.constant 0 : index
    %c0_0 = arith.constant 0 : index
    %0 = vector.load %arg1[%c0, %c0_0] : memref<1x512xf32, #tpu.memory_space<vmem>>, vector<1x512xf32>
    %cst = arith.constant 5.000000e-01 : f32
    %1 = vector.broadcast %cst : f32 to vector<1x512xf32>
    %2 = arith.mulf %1, %0 : vector<1x512xf32>
    %cst_1 = arith.constant 0.707106769 : f32
    %3 = vector.broadcast %cst_1 : f32 to vector<1x512xf32>
    %4 = arith.mulf %0, %3 : vector<1x512xf32>
    %5 = math.erf %4 : vector<1x512xf32>
    %cst_2 = arith.constant 1.000000e+00 : f32
    %6 = vector.broadcast %cst_2 : f32 to vector<1x512xf32>
    %7 = arith.addf %6, %5 : vector<1x512xf32>
    %8 = arith.mulf %2, %7 : vector<1x512xf32>
    %c0_3 = arith.constant 0 : index
    %c0_4 = arith.constant 0 : index
    %9 = vector.load %arg2[%c0_3, %c0_4] : memref<1x512xf32, #tpu.memory_space<vmem>>, vector<1x512xf32>
    tpu.vector_store %arg2[%c0_3, %c0_4], %8 {strides = array<i32>} : memref<1x512xf32, #tpu.memory_space<vmem>>, vector<1x512xf32>,
    return
  }
  func.func @transform_0(%arg0: i32) -> (i32, i32) {
    %c0_i32 = arith.constant 0 : i32
    %c0_i32_0 = arith.constant 0 : i32
    return %arg0, %c0_i32 : i32, i32
  }
  func.func @transform_1(%arg0: i32) -> (i32, i32) {
    %c0_i32 = arith.constant 0 : i32
    %c0_i32_0 = arith.constant 0 : i32
    return %arg0, %c0_i32 : i32, i32
  }
}

</mosaic_0001>

<llo_original>
// kernel: tpu_custom_call.1
$region0: #{tpu_custom_call.1}
  #allocation0 [shape = 'u32[]', space=smem, size = 0x4, offset = 0x4, fixed_abs, tag = 'smem constant byte address 0x4 - core index']
  #allocation1 [shape = 'u32[144,128]{1,0:T(1,128)}', space=vmem, size = 0x12000, scoped, tag = 'internal scratch']
  %s0 = inlined_call_operand.hbm [shape: f32[1,512], index: 0, kind: input, shape index: {}]
  %s1 = inlined_call_operand.hbm [shape: f32[1,512], index: 1, kind: output, shape index: {}]
  %s2 = sld [smem:[#allocation0]]
  $region18: #{tpu_custom_call.1} parent=0
    _
  %s4 = ssub.s32 1, %s2
  %s5 = scalar_select 0, %s4, %s2
  $region1: #{tpu_custom_call.1} parent=0
    #allocation2 [shape = 'u8[2048]{0}', space=vmem, size = 0x800, scoped, tag = 'input window, operand 0, single buffered']
    #allocation3 [shape = 's32[1]{0}', space=sflag, size = 0x4, scoped, tag = 'scoped memory for tpu_custom_call.1']
    #allocation4 [shape = 's32[1]{0}', space=sflag, size = 0x4, scoped, tag = 'scoped memory for tpu_custom_call.1']
    #allocation5 [shape = 'u8[2048]{0}', space=vmem, size = 0x800, scoped, tag = 'output window, operand 0, single buffered']
    %6 = vsyncpa [#allocation3], 0
    %7 = vsyncpa [#allocation4], 0
    // Predicated region
    $region2: #{tpu_custom_call.1} parent=1 // pred_check
      _
    $region3: #{tpu_custom_call.1} parent=1 // pred_check_branch
      %9 = sbr.rel (0) target = $region5
    $region4: #{tpu_custom_call.1} parent=1 // pred_region
      %s11 = ssub.s32 64, 64
      %12 = vsyncadd [#allocation3], %s11
      %s14 = sshll.u32 [#allocation2], 4
      %s15 = int_to_ptr.vmem [resolvable:$true] %s14
      %17 = dma.hbm_to_vmem [thread:$0]  %s0, 64, %s15, [#allocation3]
    $region5: #{tpu_custom_call.1} parent=1 // pred_fallthru
      _
    // Predicated region
    $region6: #{tpu_custom_call.1} parent=1 // pred_check
      _
    $region7: #{tpu_custom_call.1} parent=1 // pred_check_branch
      %19 = sbr.rel (0) target = $region9
    $region8: #{tpu_custom_call.1} parent=1 // pred_region
      %20 = dma.done [#allocation3], 64
    $region9: #{tpu_custom_call.1} parent=1 // pred_fallthru
      _
    %v21 = vld [vmem:[#allocation2] sm:$0xf]
    %v22 = vmul.f32 %v21, 0.5
    %v23 = vmul.f32 %v21, 0.70710677
    %v24 = verf.f32.pop %v23
    %v25 = vadd.f32 %v24, 1.0
    %v26 = vmul.f32 %v22, %v25
    %v27 = vlaneseq
    %vm28 = vcmp.ge.s32.totalorder %v27, 0
    %vm29 = vcmp.lt.s32.totalorder %v27, 512
    %vm30 = vmand %vm28, %vm29
    %31 = vst.msk [vmem:[#allocation5] sm:$0xf] %vm30, %v26
    // Predicated region
    $region10: #{tpu_custom_call.1} parent=1 // pred_check
      _
    $region11: #{tpu_custom_call.1} parent=1 // pred_check_branch
      %33 = sbr.rel (0) target = $region13
    $region12: #{tpu_custom_call.1} parent=1 // pred_region
      %s35 = ssub.s32 64, 64
      %36 = vsyncadd [#allocation4], %s35
      %s38 = sshll.u32 [#allocation5], 4
      %s39 = int_to_ptr.vmem [resolvable:$true] %s38
      %41 = dma.vmem_to_hbm [thread:$0]  %s39, 64, %s1, [#allocation4]
    $region13: #{tpu_custom_call.1} parent=1 // pred_fallthru
      _
    // Predicated region
    $region14: #{tpu_custom_call.1} parent=1 // pred_check
      _
    $region15: #{tpu_custom_call.1} parent=1 // pred_check_branch
      %43 = sbr.rel (0) target = $region17
    $region16: #{tpu_custom_call.1} parent=1 // pred_region
      %44 = dma.done [#allocation4], 64
    $region17: #{tpu_custom_call.1} parent=1 // pred_fallthru
      _
    %45 = vsyncpa [#allocation3], 1
    %46 = vsyncpa [#allocation4], 1

</llo_original>
